<compile_context>
chip_gen: v6e
topology: v6e:2x2x1
jax: 0.10.0
libtpu: 0.0.40
codegen_flags: <defaults>
</compile_context>

<pallas_src>
import functools

import jax
import jax.numpy as jnp
from jax import lax
from jax.experimental import pallas as pl
from jax.experimental.pallas import tpu as pltpu


D_IN, D_H1, D_H2, D_OUT = 10, 16, 32, 64

PACK = 4                 # samples packed per kernel row -> output lane width = 256
ROW_ALIGN = 8            # sublane alignment for the second-to-last block dim
MAX_TILE_ROWS = 2048     # packed rows per grid step (= 8192 samples). Out tile = 2 MiB f32;
                         # double-buffered in+out+weights + live h1/h2 ~ 6.5 MiB, safely
                         # under v5e's 16 MiB default scoped-VMEM limit (v6e/v7x trivial).
USE_TANH_GELU = False    # False = exact-erf GELU (PyTorch parity). True routes the
                         # transcendental through the EUP on v7x (numerics change slightly).


def _gelu(x):
    if USE_TANH_GELU:
        c = jnp.float32(0.7978845608028654)  # sqrt(2/pi)
        return 0.5 * x * (1.0 + jnp.tanh(c * (x + 0.044715 * x * x * x)))
    # PyTorch nn.GELU() default: 0.5 * x * (1 + erf(x / sqrt(2)))
    return 0.5 * x * (1.0 + lax.erf(x * jnp.float32(0.7071067811865476)))


def label_encoder_kernel(x_ref, w1_ref, b1_ref, w2_ref, b2_ref, w3_ref, b3_ref, o_ref):
    x = x_ref[...]                                                        # (T, PACK*10) f32
    h1 = _gelu(jnp.dot(x, w1_ref[...],
                       preferred_element_type=jnp.float32) + b1_ref[...])  # (T, PACK*16)
    h2 = _gelu(jnp.dot(h1, w2_ref[...],
                       preferred_element_type=jnp.float32) + b2_ref[...])  # (T, PACK*32)
    o_ref[...] = jnp.dot(h2, w3_ref[...],
                         preferred_element_type=jnp.float32) + b3_ref[...]  # (T, PACK*64)


def _round_up(n, m):
    return ((n + m - 1) // m) * m


def _choose_tile_rows(rows, cap):
    # Prefer >= 2 grid steps (v7x has 2 TensorCores; "parallel" shards the batch axis),
    # but never exceed the VMEM-safe cap and never go below one sublane group.
    half = _round_up(pl.cdiv(rows, 2), ROW_ALIGN)
    return max(ROW_ALIGN, min(cap, half))


def pack_params(params):
    """One-time packing: block-diagonal kron(I_PACK, W) weights + tiled biases.

    Hoisted out of the per-call path (perf review item)."""
    w1, b1, w2, b2, w3, b3 = (params[k] for k in ("w1", "b1", "w2", "b2", "w3", "b3"))
    eye = jnp.eye(PACK, dtype=jnp.float32)
    return {
        "w1p": jnp.kron(eye, w1),                              # (PACK*10, PACK*16)
        "b1p": jnp.tile(b1, PACK).reshape(1, PACK * D_H1),
        "w2p": jnp.kron(eye, w2),                              # (PACK*16, PACK*32)
        "b2p": jnp.tile(b2, PACK).reshape(1, PACK * D_H2),
        "w3p": jnp.kron(eye, w3),                              # (PACK*32, PACK*64)
        "b3p": jnp.tile(b3, PACK).reshape(1, PACK * D_OUT),
    }


@functools.partial(jax.jit, static_argnames=("max_tile_rows",))
def label_encoder(x, packed, *, max_tile_rows=MAX_TILE_ROWS):
    """x: (B, 10) float32. packed: output of pack_params()."""
    B, d_in = x.shape
    assert d_in == D_IN

    # ---- minimal tail padding: only up to a multiple of PACK*ROW_ALIGN (32 samples) ----
    b_pad = _round_up(B, PACK * ROW_ALIGN)
    if b_pad != B:
        x = jnp.pad(x, ((0, b_pad - B), (0, 0)))
    rows = b_pad // PACK
    x_packed = x.reshape(rows, PACK * D_IN)      # row i = [x_{4i} | x_{4i+1} | x_{4i+2} | x_{4i+3}]

    tile_rows = _choose_tile_rows(rows, max_tile_rows)
    n_tiles = pl.cdiv(rows, tile_rows)           # last block may be partial; Pallas masks it

    def whole(shape):
        # full-array block, constant index_map -> DMA'd once, reused every step
        return pl.BlockSpec(shape, lambda i: tuple(0 for _ in shape))

    out_packed = pl.pallas_call(
        label_encoder_kernel,
        out_shape=jax.ShapeDtypeStruct((rows, PACK * D_OUT), jnp.float32),
        grid_spec=pltpu.PrefetchScalarGridSpec(
            num_scalar_prefetch=0,
            grid=(n_tiles,),
            in_specs=[
                pl.BlockSpec((tile_rows, PACK * D_IN), lambda i: (i, 0)),  # x tile
                whole((PACK * D_IN, PACK * D_H1)),
                whole((1, PACK * D_H1)),
                whole((PACK * D_H1, PACK * D_H2)),
                whole((1, PACK * D_H2)),
                whole((PACK * D_H2, PACK * D_OUT)),
                whole((1, PACK * D_OUT)),
            ],
            out_specs=pl.BlockSpec((tile_rows, PACK * D_OUT), lambda i: (i, 0)),
        ),
        compiler_params=pltpu.CompilerParams(
            dimension_semantics=("parallel",),   # batch tiles shard across v7x's 2 TCs
        ),
    )(x_packed, packed["w1p"], packed["b1p"], packed["w2p"], packed["b2p"],
      packed["w3p"], packed["b3p"])

    # (rows, PACK*64) row-major == (b_pad, 64) -> bitcast reshape; slice only if ragged.
    out = out_packed.reshape(b_pad, D_OUT)
    return out if b_pad == B else out[:B]


def init_params(key):
    """Deterministic synthetic init (same shapes as the PyTorch module)."""
    ks = jax.random.split(key, 6)
    scale = 0.1
    return {
        "w1": scale * jax.random.normal(ks[0], (D_IN, D_H1), jnp.float32),
        "b1": scale * jax.random.normal(ks[1], (D_H1,), jnp.float32),
        "w2": scale * jax.random.normal(ks[2], (D_H1, D_H2), jnp.float32),
        "b2": scale * jax.random.normal(ks[3], (D_H2,), jnp.float32),
        "w3": scale * jax.random.normal(ks[4], (D_H2, D_OUT), jnp.float32),
        "b3": scale * jax.random.normal(ks[5], (D_OUT,), jnp.float32),
    }


def _ref_forward(x, p):
    h = jax.nn.gelu(x @ p["w1"] + p["b1"], approximate=False)
    h = jax.nn.gelu(h @ p["w2"] + p["b2"], approximate=False)
    return h @ p["w3"] + p["b3"]


if __name__ == "__main__":
    key = jax.random.PRNGKey(0)
    k_x, k_p = jax.random.split(key)
    params = init_params(k_p)
    packed = jax.tree_util.tree_map(jax.block_until_ready, pack_params(params))  # hoisted, once

    # B=16: small clean case; B=13: ragged tail-padding + slice path;
    # B=200: multi-tile grid with a partial (masked) last block.
    for B in (16, 13, 200):
        x = jax.random.normal(jax.random.fold_in(k_x, B), (B, D_IN), jnp.float32)
        out = jax.block_until_ready(label_encoder(x, packed))
        ref = _ref_forward(x, params)
        assert out.shape == (B, D_OUT)
        assert jnp.allclose(out, ref, atol=1e-5, rtol=1e-4), f"mismatch vs reference (B={B})"

    print("KERNEL_OK")
</pallas_src>

<mosaic_0001>
module attributes {stable_mosaic.version = 11 : i64} {
  func.func @label_encoder_kernel(%arg0: i32, %arg1: memref<8x40xf32, #tpu.memory_space<vmem>>, %arg2: memref<40x64xf32, #tpu.memory_space<vmem>>, %arg3: memref<1x64xf32, #tpu.memory_space<vmem>>, %arg4: memref<64x128xf32, #tpu.memory_space<vmem>>, %arg5: memref<1x128xf32, #tpu.memory_space<vmem>>, %arg6: memref<128x256xf32, #tpu.memory_space<vmem>>, %arg7: memref<1x256xf32, #tpu.memory_space<vmem>>, %arg8: memref<8x256xf32, #tpu.memory_space<vmem>>) attributes {dimension_semantics = [#tpu.dimension_semantics<parallel>], iteration_bounds = array<i64: 1>, scalar_prefetch = 0 : i64, scratch_operands = 0 : i64, tpu.core_type = #tpu.core_type<tc>, window_params = [{transform_indices = @transform_0, window_bounds = array<i64: 8, 40>}, {pipeline_mode = #tpu.pipeline_mode<synchronous>, transform_indices = @transform_1, window_bounds = array<i64: 40, 64>}, {pipeline_mode = #tpu.pipeline_mode<synchronous>, transform_indices = @transform_2, window_bounds = array<i64: 1, 64>}, {pipeline_mode = #tpu.pipeline_mode<synchronous>, transform_indices = @transform_3, window_bounds = array<i64: 64, 128>}, {pipeline_mode = #tpu.pipeline_mode<synchronous>, transform_indices = @transform_4, window_bounds = array<i64: 1, 128>}, {pipeline_mode = #tpu.pipeline_mode<synchronous>, transform_indices = @transform_5, window_bounds = array<i64: 128, 256>}, {pipeline_mode = #tpu.pipeline_mode<synchronous>, transform_indices = @transform_6, window_bounds = array<i64: 1, 256>}, {transform_indices = @transform_7, window_bounds = array<i64: 8, 256>}]} {
    %c0 = arith.constant 0 : index
    %c0_0 = arith.constant 0 : index
    %0 = vector.load %arg1[%c0, %c0_0] : memref<8x40xf32, #tpu.memory_space<vmem>>, vector<8x40xf32>
    %c0_1 = arith.constant 0 : index
    %c0_2 = arith.constant 0 : index
    %1 = vector.load %arg2[%c0_1, %c0_2] : memref<40x64xf32, #tpu.memory_space<vmem>>, vector<40x64xf32>
    %cst = arith.constant dense<0.000000e+00> : vector<8x64xf32>
    %2 = tpu.matmul %0, %1, %cst {dimension_numbers = #tpu.dot_dimension_numbers<[1], [0], [0], [1], [0, 0, 1, 1], [], []>} : vector<8x40xf32>, vector<40x64xf32>, vector<8x64xf32> -> vector<8x64xf32>
    %c0_3 = arith.constant 0 : index
    %c0_4 = arith.constant 0 : index
    %3 = vector.load %arg3[%c0_3, %c0_4] : memref<1x64xf32, #tpu.memory_space<vmem>>, vector<1x64xf32>
    %4 = vector.broadcast %3 : vector<1x64xf32> to vector<8x64xf32>
    %5 = arith.addf %2, %4 : vector<8x64xf32>
    %cst_5 = arith.constant 5.000000e-01 : f32
    %6 = vector.broadcast %cst_5 : f32 to vector<8x64xf32>
    %7 = arith.mulf %6, %5 : vector<8x64xf32>
    %cst_6 = arith.constant 0.707106769 : f32
    %8 = vector.broadcast %cst_6 : f32 to vector<8x64xf32>
    %9 = arith.mulf %5, %8 : vector<8x64xf32>
    %10 = math.erf %9 : vector<8x64xf32>
    %cst_7 = arith.constant 1.000000e+00 : f32
    %11 = vector.broadcast %cst_7 : f32 to vector<8x64xf32>
    %12 = arith.addf %11, %10 : vector<8x64xf32>
    %13 = arith.mulf %7, %12 : vector<8x64xf32>
    %c0_8 = arith.constant 0 : index
    %c0_9 = arith.constant 0 : index
    %14 = vector.load %arg4[%c0_8, %c0_9] : memref<64x128xf32, #tpu.memory_space<vmem>>, vector<64x128xf32>
    %cst_10 = arith.constant dense<0.000000e+00> : vector<8x128xf32>
    %15 = tpu.matmul %13, %14, %cst_10 {dimension_numbers = #tpu.dot_dimension_numbers<[1], [0], [0], [1], [0, 0, 1, 1], [], []>} : vector<8x64xf32>, vector<64x128xf32>, vector<8x128xf32> -> vector<8x128xf32>
    %c0_11 = arith.constant 0 : index
    %c0_12 = arith.constant 0 : index
    %16 = vector.load %arg5[%c0_11, %c0_12] : memref<1x128xf32, #tpu.memory_space<vmem>>, vector<1x128xf32>
    %17 = vector.broadcast %16 : vector<1x128xf32> to vector<8x128xf32>
    %18 = arith.addf %15, %17 : vector<8x128xf32>
    %cst_13 = arith.constant 5.000000e-01 : f32
    %19 = vector.broadcast %cst_13 : f32 to vector<8x128xf32>
    %20 = arith.mulf %19, %18 : vector<8x128xf32>
    %cst_14 = arith.constant 0.707106769 : f32
    %21 = vector.broadcast %cst_14 : f32 to vector<8x128xf32>
    %22 = arith.mulf %18, %21 : vector<8x128xf32>
    %23 = math.erf %22 : vector<8x128xf32>
    %cst_15 = arith.constant 1.000000e+00 : f32
    %24 = vector.broadcast %cst_15 : f32 to vector<8x128xf32>
    %25 = arith.addf %24, %23 : vector<8x128xf32>
    %26 = arith.mulf %20, %25 : vector<8x128xf32>
    %c0_16 = arith.constant 0 : index
    %c0_17 = arith.constant 0 : index
    %27 = vector.load %arg6[%c0_16, %c0_17] : memref<128x256xf32, #tpu.memory_space<vmem>>, vector<128x256xf32>
    %cst_18 = arith.constant dense<0.000000e+00> : vector<8x256xf32>
    %28 = tpu.matmul %26, %27, %cst_18 {dimension_numbers = #tpu.dot_dimension_numbers<[1], [0], [0], [1], [0, 0, 1, 1], [], []>} : vector<8x128xf32>, vector<128x256xf32>, vector<8x256xf32> -> vector<8x256xf32>
    %c0_19 = arith.constant 0 : index
    %c0_20 = arith.constant 0 : index
    %29 = vector.load %arg7[%c0_19, %c0_20] : memref<1x256xf32, #tpu.memory_space<vmem>>, vector<1x256xf32>
    %30 = vector.broadcast %29 : vector<1x256xf32> to vector<8x256xf32>
    %31 = arith.addf %28, %30 : vector<8x256xf32>
    %c0_21 = arith.constant 0 : index
    %c0_22 = arith.constant 0 : index
    %32 = vector.load %arg8[%c0_21, %c0_22] : memref<8x256xf32, #tpu.memory_space<vmem>>, vector<8x256xf32>
    tpu.vector_store %arg8[%c0_21, %c0_22], %31 {strides = array<i32>} : memref<8x256xf32, #tpu.memory_space<vmem>>, vector<8x256xf32>,
    return
  }
  func.func @transform_0(%arg0: i32) -> (i32, i32) {
    %c0_i32 = arith.constant 0 : i32
    %c0_i32_0 = arith.constant 0 : i32
    return %arg0, %c0_i32 : i32, i32
  }
  func.func @transform_1(%arg0: i32) -> (i32, i32) {
    %c0_i32 = arith.constant 0 : i32
    %c0_i32_0 = arith.constant 0 : i32
    %c0_i32_1 = arith.constant 0 : i32
    return %c0_i32, %c0_i32_0 : i32, i32
  }
  func.func @transform_2(%arg0: i32) -> (i32, i32) {
    %c0_i32 = arith.constant 0 : i32
    %c0_i32_0 = arith.constant 0 : i32
    %c0_i32_1 = arith.constant 0 : i32
    return %c0_i32, %c0_i32_0 : i32, i32
  }
  func.func @transform_3(%arg0: i32) -> (i32, i32) {
    %c0_i32 = arith.constant 0 : i32
    %c0_i32_0 = arith.constant 0 : i32
    %c0_i32_1 = arith.constant 0 : i32
    return %c0_i32, %c0_i32_0 : i32, i32
  }
  func.func @transform_4(%arg0: i32) -> (i32, i32) {
    %c0_i32 = arith.constant 0 : i32
    %c0_i32_0 = arith.constant 0 : i32
    %c0_i32_1 = arith.constant 0 : i32
    return %c0_i32, %c0_i32_0 : i32, i32
  }
  func.func @transform_5(%arg0: i32) -> (i32, i32) {
    %c0_i32 = arith.constant 0 : i32
    %c0_i32_0 = arith.constant 0 : i32
    %c0_i32_1 = arith.constant 0 : i32
    return %c0_i32, %c0_i32_0 : i32, i32
  }
  func.func @transform_6(%arg0: i32) -> (i32, i32) {
    %c0_i32 = arith.constant 0 : i32
    %c0_i32_0 = arith.constant 0 : i32
    %c0_i32_1 = arith.constant 0 : i32
    return %c0_i32, %c0_i32_0 : i32, i32
  }
  func.func @transform_7(%arg0: i32) -> (i32, i32) {
    %c0_i32 = arith.constant 0 : i32
    %c0_i32_0 = arith.constant 0 : i32
    return %arg0, %c0_i32 : i32, i32
  }
}

</mosaic_0001>

<llo_original>
// kernel: label_encoder.1
$region0: #{label_encoder.1}
  #allocation0 [shape = 'u32[]', space=smem, size = 0x4, offset = 0x4, fixed_abs, tag = 'smem constant byte address 0x4 - core index']
  #allocation1 [shape = 'u32[144,128]{1,0:T(1,128)}', space=vmem, size = 0x12000, scoped, tag = 'internal scratch']
  %s0 = inlined_call_operand.vmem [shape: f32[8,40], index: 0, kind: input, shape index: {}]
  %s1 = inlined_call_operand.hbm [shape: f32[40,64], index: 1, kind: input, shape index: {}]
  %s2 = inlined_call_operand.vmem [shape: f32[1,64], index: 2, kind: input, shape index: {}]
  %s3 = inlined_call_operand.vmem [shape: f32[64,128], index: 3, kind: input, shape index: {}]
  %s4 = inlined_call_operand.vmem [shape: f32[1,128], index: 4, kind: input, shape index: {}]
  %s5 = inlined_call_operand.hbm [shape: f32[128,256], index: 5, kind: input, shape index: {}]
  %s6 = inlined_call_operand.vmem [shape: f32[1,256], index: 6, kind: input, shape index: {}]
  %s7 = inlined_call_operand.vmem [shape: f32[8,256], index: 7, kind: output, shape index: {}]
  %s8 = sld [smem:[#allocation0]]
  $region46: #{label_encoder.1} parent=0
    _
  %s10 = ssub.s32 1, %s8
  %s11 = scalar_select 0, %s10, %s8
  $region1: #{label_encoder.1} parent=0
    #allocation2 [shape = 'u8[20480]{0}', space=vmem, size = 0x5000, scoped, tag = 'input window, operand 1, single buffered']
    #allocation3 [shape = 's32[1]{0}', space=sflag, size = 0x4, scoped, tag = 'scoped memory for label_encoder.1']
    #allocation4 [shape = 'u8[131072]{0}', space=vmem, size = 0x20000, scoped, tag = 'input window, operand 5, single buffered']
    #allocation5 [shape = 's32[1]{0}', space=sflag, size = 0x4, scoped, tag = 'scoped memory for label_encoder.1']
    %12 = vsyncpa [#allocation3], 0
    %13 = vsyncpa [#allocation5], 0
    // Predicated region
    $region2: #{label_encoder.1} parent=1 // pred_check
      _
    $region3: #{label_encoder.1} parent=1 // pred_check_branch
      %15 = sbr.rel (0) target = $region5
    $region4: #{label_encoder.1} parent=1 // pred_region
      _
    $region5: #{label_encoder.1} parent=1 // pred_fallthru
      _
    // Predicated region
    $region6: #{label_encoder.1} parent=1 // pred_check
      _
    $region7: #{label_encoder.1} parent=1 // pred_check_branch
      %17 = sbr.rel (0) target = $region9
    $region8: #{label_encoder.1} parent=1 // pred_region
      %s19 = ssub.s32 640, 640
      %20 = vsyncadd [#allocation3], %s19
      %s21 = sshll.u32 [#allocation2], 4
      %s22 = int_to_ptr.vmem [resolvable:$true] %s21
      %27 = dma.hbm_to_vmem [thread:$0]  %s1, 640, %s22, [#allocation3], 128, 128, 8
    $region9: #{label_encoder.1} parent=1 // pred_fallthru
      _
    // Predicated region
    $region10: #{label_encoder.1} parent=1 // pred_check
      _
    $region11: #{label_encoder.1} parent=1 // pred_check_branch
      %29 = sbr.rel (0) target = $region13
    $region12: #{label_encoder.1} parent=1 // pred_region
      _
    $region13: #{label_encoder.1} parent=1 // pred_fallthru
      _
    // Predicated region
    $region14: #{label_encoder.1} parent=1 // pred_check
      _
    $region15: #{label_encoder.1} parent=1 // pred_check_branch
      %31 = sbr.rel (0) target = $region17
    $region16: #{label_encoder.1} parent=1 // pred_region
      _
    $region17: #{label_encoder.1} parent=1 // pred_fallthru
      _
    // Predicated region
    $region18: #{label_encoder.1} parent=1 // pred_check
      _
    $region19: #{label_encoder.1} parent=1 // pred_check_branch
      %33 = sbr.rel (0) target = $region21
    $region20: #{label_encoder.1} parent=1 // pred_region
      _
    $region21: #{label_encoder.1} parent=1 // pred_fallthru
      _
    // Predicated region
    $region22: #{label_encoder.1} parent=1 // pred_check
      _
    $region23: #{label_encoder.1} parent=1 // pred_check_branch
      %35 = sbr.rel (0) target = $region25
    $region24: #{label_encoder.1} parent=1 // pred_region
      %s37 = ssub.s32 4096, 4096
      %38 = vsyncadd [#allocation5], %s37
      %s39 = sshll.u32 [#allocation4], 4
      %s40 = int_to_ptr.vmem [resolvable:$true] %s39
      %45 = dma.hbm_to_vmem [thread:$0]  %s5, 4096, %s40, [#allocation5], 256, 256, 16
    $region25: #{label_encoder.1} parent=1 // pred_fallthru
      _
    // Predicated region
    $region26: #{label_encoder.1} parent=1 // pred_check
      _
    $region27: #{label_encoder.1} parent=1 // pred_check_branch
      %47 = sbr.rel (0) target = $region29
    $region28: #{label_encoder.1} parent=1 // pred_region
      _
    $region29: #{label_encoder.1} parent=1 // pred_fallthru
      _
    // Predicated region
    $region30: #{label_encoder.1} parent=1 // pred_check
      _
    $region31: #{label_encoder.1} parent=1 // pred_check_branch
      %49 = sbr.rel (0) target = $region33
    $region32: #{label_encoder.1} parent=1 // pred_region
      %50 = dma.done [#allocation3], 640
    $region33: #{label_encoder.1} parent=1 // pred_fallthru
      _
    // Predicated region
    $region34: #{label_encoder.1} parent=1 // pred_check
      _
    $region35: #{label_encoder.1} parent=1 // pred_check_branch
      %52 = sbr.rel (0) target = $region37
    $region36: #{label_encoder.1} parent=1 // pred_region
      %53 = dma.done [#allocation5], 4096
    $region37: #{label_encoder.1} parent=1 // pred_fallthru
      _
    %v54 = vld [vmem:[%s0] sm:$0xff]
    %v55 = vld [vmem:[#allocation2] sm:$0xff]
    %v56 = vld [vmem:[#allocation2 + $0x8] sm:$0xff]
    %v57 = vld [vmem:[#allocation2 + $0x10] sm:$0xff]
    %v58 = vld [vmem:[#allocation2 + $0x18] sm:$0xff]
    %v59 = vld [vmem:[#allocation2 + $0x20] sm:$0xff]
    %v60 = vld [vmem:[%s2] sm:$0x1]
    %v62 = vlaneseq
    %v63 = vshrl.u32 %v62, 7
    %v64 = vsub.s32 0, %v63
    %v65 = vrot.slane %v60, %v64
    %vm67 = vcmask 326656
    %v69 = vsel %vm67, %v54, 0
    %71 = vmatprep.subr.mxu0 0.0
    %72 = vmatpush1.msra.mxu0 0.0
    %73 = vmatprep.subr.mxu0 0.0
    %74 = vmatpush1.msra.mxu0 0.0
    %75 = vmatprep.subr.mxu0 0.0
    %76 = vmatpush1.msra.mxu0 0.0
    %77 = vmatprep.subr.mxu0 0.0
    %78 = vmatpush1.msra.mxu0 0.0
    %79 = vmatprep.subr.mxu0 0.0
    %80 = vmatpush1.msra.mxu0 0.0
    %81 = vmatprep.subr.mxu0 0.0
    %82 = vmatpush1.msra.mxu0 0.0
    %83 = vmatprep.subr.mxu0 0.0
    %84 = vmatpush1.msra.mxu0 0.0
    %85 = vmatprep.subr.mxu0 0.0
    %86 = vmatpush1.msra.mxu0 0.0
    %87 = vmatprep.subr.mxu0 0.0
    %88 = vmatpush1.msra.mxu0 0.0
    %89 = vmatprep.subr.mxu0 0.0
    %90 = vmatpush1.msra.mxu0 0.0
    %91 = vmatprep.subr.mxu0 0.0
    %92 = vmatpush1.msra.mxu0 0.0
    %93 = vmatprep.subr.mxu0 0.0
    %94 = vmatpush1.msra.mxu0 %v59
    %95 = vmatprep.subr.mxu0 0.0
    %96 = vmatpush1.msra.mxu0 %v58
    %97 = vmatprep.subr.mxu0 0.0
    %98 = vmatpush1.msra.mxu0 %v57
    %99 = vmatprep.subr.mxu0 0.0
    %100 = vmatpush1.msra.mxu0 %v56
    %101 = vmatprep.subr.mxu0 0.0
    %102 = vmatpush1.msra.mxu0 %v55
    %103 = vmatprep.subr.mxu0 0.0
    %104 = vmatpush2.msra.mxu0 0.0
    %105 = vmatprep.subr.mxu0 0.0
    %106 = vmatpush2.msra.mxu0 0.0
    %107 = vmatprep.subr.mxu0 0.0
    %108 = vmatpush2.msra.mxu0 0.0
    %109 = vmatprep.subr.mxu0 0.0
    %110 = vmatpush2.msra.mxu0 0.0
    %111 = vmatprep.subr.mxu0 0.0
    %112 = vmatpush2.msra.mxu0 0.0
    %113 = vmatprep.subr.mxu0 0.0
    %114 = vmatpush2.msra.mxu0 0.0
    %115 = vmatprep.subr.mxu0 0.0
    %116 = vmatpush2.msra.mxu0 0.0
    %117 = vmatprep.subr.mxu0 0.0
    %118 = vmatpush2.msra.mxu0 0.0
    %119 = vmatprep.subr.mxu0 0.0
    %120 = vmatpush2.msra.mxu0 0.0
    %121 = vmatprep.subr.mxu0 0.0
    %122 = vmatpush2.msra.mxu0 0.0
    %123 = vmatprep.subr.mxu0 0.0
    %124 = vmatpush2.msra.mxu0 0.0
    %125 = vmatprep.subr.mxu0 0.0
    %126 = vmatpush2.msra.mxu0 0.0
    %127 = vmatprep.subr.mxu0 0.0
    %128 = vmatpush2.msra.mxu0 0.0
    %129 = vmatprep.subr.mxu0 0.0
    %130 = vmatpush2.msra.mxu0 0.0
    %131 = vmatprep.subr.mxu0 0.0
    %132 = vmatpush2.msra.mxu0 0.0
    %133 = vmatprep.subr.mxu0 0.0
    %134 = vmatpush2.msra.mxu0 0.0
    %135 = vmatprep.mubr.f32.mxu0 0.0
    %136 = vmatmul.mubr.f32.gmra.mxu0 %v69
    %v137 = vpop.f32.mrf.mxu0
    %v138 = vadd.f32 %v65, %v137
    %v139 = vpop.f32.mrf.mxu0
    %140 = vdwg.mxu0
    %v141 = vmul.f32 %v138, 0.5
    %v142 = vmul.f32 %v138, 0.70710677
    %v143 = verf.f32.pop %v142
    %v144 = vadd.f32 %v143, 1.0
    %v145 = vmul.f32 %v141, %v144
    %v146 = vld [vmem:[%s3] sm:$0xff]
    %v147 = vld [vmem:[%s3 + $0x8] sm:$0xff]
    %v148 = vld [vmem:[%s3 + $0x10] sm:$0xff]
    %v149 = vld [vmem:[%s3 + $0x18] sm:$0xff]
    %v150 = vld [vmem:[%s3 + $0x20] sm:$0xff]
    %v151 = vld [vmem:[%s3 + $0x28] sm:$0xff]
    %v152 = vld [vmem:[%s3 + $0x30] sm:$0xff]
    %v153 = vld [vmem:[%s3 + $0x38] sm:$0xff]
    %v154 = vld [vmem:[%s4] sm:$0x1]
    %v156 = vlaneseq
    %v157 = vshrl.u32 %v156, 7
    %v158 = vsub.s32 0, %v157
    %v159 = vrot.slane %v154, %v158
    %vm161 = vcmask 523264
    %v163 = vsel %vm161, %v145, 0
    %165 = vmatprep.subr.mxu0 0.0
    %166 = vmatpush1.msra.mxu0 0.0
    %167 = vmatprep.subr.mxu0 0.0
    %168 = vmatpush1.msra.mxu0 0.0
    %169 = vmatprep.subr.mxu0 0.0
    %170 = vmatpush1.msra.mxu0 0.0
    %171 = vmatprep.subr.mxu0 0.0
    %172 = vmatpush1.msra.mxu0 0.0
    %173 = vmatprep.subr.mxu0 0.0
    %174 = vmatpush1.msra.mxu0 0.0
    %175 = vmatprep.subr.mxu0 0.0
    %176 = vmatpush1.msra.mxu0 0.0
    %177 = vmatprep.subr.mxu0 0.0
    %178 = vmatpush1.msra.mxu0 0.0
    %179 = vmatprep.subr.mxu0 0.0
    %180 = vmatpush1.msra.mxu0 0.0
    %181 = vmatprep.subr.mxu0 0.0
    %182 = vmatpush1.msra.mxu0 %v153
    %183 = vmatprep.subr.mxu0 0.0
    %184 = vmatpush1.msra.mxu0 %v152
    %185 = vmatprep.subr.mxu0 0.0
    %186 = vmatpush1.msra.mxu0 %v151
    %187 = vmatprep.subr.mxu0 0.0
    %188 = vmatpush1.msra.mxu0 %v150
    %189 = vmatprep.subr.mxu0 0.0
    %190 = vmatpush1.msra.mxu0 %v149
    %191 = vmatprep.subr.mxu0 0.0
    %192 = vmatpush1.msra.mxu0 %v148
    %193 = vmatprep.subr.mxu0 0.0
    %194 = vmatpush1.msra.mxu0 %v147
    %195 = vmatprep.subr.mxu0 0.0
    %196 = vmatpush1.msra.mxu0 %v146
    %197 = vmatprep.subr.mxu0 0.0
    %198 = vmatpush2.msra.mxu0 0.0
    %199 = vmatprep.subr.mxu0 0.0
    %200 = vmatpush2.msra.mxu0 0.0
    %201 = vmatprep.subr.mxu0 0.0
    %202 = vmatpush2.msra.mxu0 0.0
    %203 = vmatprep.subr.mxu0 0.0
    %204 = vmatpush2.msra.mxu0 0.0
    %205 = vmatprep.subr.mxu0 0.0
    %206 = vmatpush2.msra.mxu0 0.0
    %207 = vmatprep.subr.mxu0 0.0
    %208 = vmatpush2.msra.mxu0 0.0
    %209 = vmatprep.subr.mxu0 0.0
    %210 = vmatpush2.msra.mxu0 0.0
    %211 = vmatprep.subr.mxu0 0.0
    %212 = vmatpush2.msra.mxu0 0.0
    %213 = vmatprep.subr.mxu0 0.0
    %214 = vmatpush2.msra.mxu0 0.0
    %215 = vmatprep.subr.mxu0 0.0
    %216 = vmatpush2.msra.mxu0 0.0
    %217 = vmatprep.subr.mxu0 0.0
    %218 = vmatpush2.msra.mxu0 0.0
    %219 = vmatprep.subr.mxu0 0.0
    %220 = vmatpush2.msra.mxu0 0.0
    %221 = vmatprep.subr.mxu0 0.0
    %222 = vmatpush2.msra.mxu0 0.0
    %223 = vmatprep.subr.mxu0 0.0
    %224 = vmatpush2.msra.mxu0 0.0
    %225 = vmatprep.subr.mxu0 0.0
    %226 = vmatpush2.msra.mxu0 0.0
    %227 = vmatprep.subr.mxu0 0.0
    %228 = vmatpush2.msra.mxu0 0.0
    %229 = vmatprep.mubr.f32.mxu0 0.0
    %230 = vmatmul.mubr.f32.gmra.mxu0 %v163
    %v231 = vpop.f32.mrf.mxu0
    %v232 = vadd.f32 %v159, %v231
    %v233 = vpop.f32.mrf.mxu0
    %234 = vdwg.mxu0
    %v235 = vmul.f32 %v232, 0.5
    %v236 = vmul.f32 %v232, 0.70710677
    %v237 = verf.f32.pop %v236
    %v238 = vadd.f32 %v237, 1.0
    %v239 = vmul.f32 %v235, %v238
    %v240 = vld [vmem:[#allocation4] sm:$0xff]
    %v241 = vld [vmem:[#allocation4 + $0x8] sm:$0xff]
    %v242 = vld [vmem:[#allocation4 + $0x10] sm:$0xff]
    %v243 = vld [vmem:[#allocation4 + $0x18] sm:$0xff]
    %v244 = vld [vmem:[#allocation4 + $0x20] sm:$0xff]
    %v245 = vld [vmem:[#allocation4 + $0x28] sm:$0xff]
    %v246 = vld [vmem:[#allocation4 + $0x30] sm:$0xff]
    %v247 = vld [vmem:[#allocation4 + $0x38] sm:$0xff]
    %v248 = vld [vmem:[#allocation4 + $0x40] sm:$0xff]
    %v249 = vld [vmem:[#allocation4 + $0x48] sm:$0xff]
    %v250 = vld [vmem:[#allocation4 + $0x50] sm:$0xff]
    %v251 = vld [vmem:[#allocation4 + $0x58] sm:$0xff]
    %v252 = vld [vmem:[#allocation4 + $0x60] sm:$0xff]
    %v253 = vld [vmem:[#allocation4 + $0x68] sm:$0xff]
    %v254 = vld [vmem:[#allocation4 + $0x70] sm:$0xff]
    %v255 = vld [vmem:[#allocation4 + $0x78] sm:$0xff]
    %v256 = vld [vmem:[#allocation4 + $0x80] sm:$0xff]
    %v257 = vld [vmem:[#allocation4 + $0x88] sm:$0xff]
    %v258 = vld [vmem:[#allocation4 + $0x90] sm:$0xff]
    %v259 = vld [vmem:[#allocation4 + $0x98] sm:$0xff]
    %v260 = vld [vmem:[#allocation4 + $0xa0] sm:$0xff]
    %v261 = vld [vmem:[#allocation4 + $0xa8] sm:$0xff]
    %v262 = vld [vmem:[#allocation4 + $0xb0] sm:$0xff]
    %v263 = vld [vmem:[#allocation4 + $0xb8] sm:$0xff]
    %v264 = vld [vmem:[#allocation4 + $0xc0] sm:$0xff]
    %v265 = vld [vmem:[#allocation4 + $0xc8] sm:$0xff]
    %v266 = vld [vmem:[#allocation4 + $0xd0] sm:$0xff]
    %v267 = vld [vmem:[#allocation4 + $0xd8] sm:$0xff]
    %v268 = vld [vmem:[#allocation4 + $0xe0] sm:$0xff]
    %v269 = vld [vmem:[#allocation4 + $0xe8] sm:$0xff]
    %v270 = vld [vmem:[#allocation4 + $0xf0] sm:$0xff]
    %v271 = vld [vmem:[#allocation4 + $0xf8] sm:$0xff]
    %v272 = vld [vmem:[%s6] sm:$0x3]
    %v274 = vlaneseq
    %v275 = vshrl.u32 %v274, 7
    %v276 = vsub.s32 0, %v275
    %v277 = vrot.slane %v272, %v276
    %v278 = vlaneseq
    %v279 = vshrl.u32 %v278, 7
    %v280 = vsub.s32 1, %v279
    %v281 = vrot.slane %v272, %v280
    %284 = vmatprep.subr.mxu0 %v271
    %285 = vmatpush1.msra.mxu0 %v270
    %286 = vmatprep.subr.mxu0 %v269
    %287 = vmatpush1.msra.mxu0 %v268
    %288 = vmatprep.subr.mxu0 %v267
    %289 = vmatpush1.msra.mxu0 %v266
    %290 = vmatprep.subr.mxu0 %v265
    %291 = vmatpush1.msra.mxu0 %v264
    %292 = vmatprep.subr.mxu0 %v263
    %293 = vmatpush1.msra.mxu0 %v262
    %294 = vmatprep.subr.mxu0 %v261
    %295 = vmatpush1.msra.mxu0 %v260
    %296 = vmatprep.subr.mxu0 %v259
    %297 = vmatpush1.msra.mxu0 %v258
    %298 = vmatprep.subr.mxu0 %v257
    %299 = vmatpush1.msra.mxu0 %v256
    %300 = vmatprep.subr.mxu0 %v255
    %301 = vmatpush1.msra.mxu0 %v254
    %302 = vmatprep.subr.mxu0 %v253
    %303 = vmatpush1.msra.mxu0 %v252
    %304 = vmatprep.subr.mxu0 %v251
    %305 = vmatpush1.msra.mxu0 %v250
    %306 = vmatprep.subr.mxu0 %v249
    %307 = vmatpush1.msra.mxu0 %v248
    %308 = vmatprep.subr.mxu0 %v247
    %309 = vmatpush1.msra.mxu0 %v246
    %310 = vmatprep.subr.mxu0 %v245
    %311 = vmatpush1.msra.mxu0 %v244
    %312 = vmatprep.subr.mxu0 %v243
    %313 = vmatpush1.msra.mxu0 %v242
    %314 = vmatprep.subr.mxu0 %v241
    %315 = vmatpush1.msra.mxu0 %v240
    %316 = vmatprep.subr.mxu0 0.0
    %317 = vmatpush2.msra.mxu0 0.0
    %318 = vmatprep.subr.mxu0 0.0
    %319 = vmatpush2.msra.mxu0 0.0
    %320 = vmatprep.subr.mxu0 0.0
    %321 = vmatpush2.msra.mxu0 0.0
    %322 = vmatprep.subr.mxu0 0.0
    %323 = vmatpush2.msra.mxu0 0.0
    %324 = vmatprep.subr.mxu0 0.0
    %325 = vmatpush2.msra.mxu0 0.0
    %326 = vmatprep.subr.mxu0 0.0
    %327 = vmatpush2.msra.mxu0 0.0
    %328 = vmatprep.subr.mxu0 0.0
    %329 = vmatpush2.msra.mxu0 0.0
    %330 = vmatprep.subr.mxu0 0.0
    %331 = vmatpush2.msra.mxu0 0.0
    %332 = vmatprep.subr.mxu0 0.0
    %333 = vmatpush2.msra.mxu0 0.0
    %334 = vmatprep.subr.mxu0 0.0
    %335 = vmatpush2.msra.mxu0 0.0
    %336 = vmatprep.subr.mxu0 0.0
    %337 = vmatpush2.msra.mxu0 0.0
    %338 = vmatprep.subr.mxu0 0.0
    %339 = vmatpush2.msra.mxu0 0.0
    %340 = vmatprep.subr.mxu0 0.0
    %341 = vmatpush2.msra.mxu0 0.0
    %342 = vmatprep.subr.mxu0 0.0
    %343 = vmatpush2.msra.mxu0 0.0
    %344 = vmatprep.subr.mxu0 0.0
    %345 = vmatpush2.msra.mxu0 0.0
    %346 = vmatprep.subr.mxu0 0.0
    %347 = vmatpush2.msra.mxu0 0.0
    %348 = vmatprep.mubr.f32.mxu0 0.0
    %349 = vmatmul.mubr.f32.gmra.mxu0 %v239
    %v350 = vpop.f32.mrf.mxu0
    %v351 = vadd.f32 %v277, %v350
    %v352 = vpop.f32.mrf.mxu0
    %v353 = vadd.f32 %v281, %v352
    %354 = vdwg.mxu0
    %355 = vst [vmem:[%s7] sm:$0xff] %v351
    %356 = vst [vmem:[%s7 + $0x8] sm:$0xff] %v353
    // Predicated region
    $region38: #{label_encoder.1} parent=1 // pred_check
      _
    $region39: #{label_encoder.1} parent=1 // pred_check_branch
      %358 = sbr.rel (0) target = $region41
    $region40: #{label_encoder.1} parent=1 // pred_region
      _
    $region41: #{label_encoder.1} parent=1 // pred_fallthru
      _
    // Predicated region
    $region42: #{label_encoder.1} parent=1 // pred_check
      _
    $region43: #{label_encoder.1} parent=1 // pred_check_branch
      %360 = sbr.rel (0) target = $region45
    $region44: #{label_encoder.1} parent=1 // pred_region
      _
    $region45: #{label_encoder.1} parent=1 // pred_fallthru
      _
    %361 = vsyncpa [#allocation3], 1
    %362 = vsyncpa [#allocation5], 1

</llo_original>
